<compile_context>
chip_gen: v5e
topology: v5e:2x2
jax: 0.10.0
libtpu: 0.0.40
codegen_flags: <defaults>
</compile_context>

<pallas_src>
import functools

import jax
import jax.numpy as jnp
from jax.experimental import pallas as pl
from jax.experimental.pallas import tpu as pltpu

IN_F = 4
OUT_F = 3
PAD = 128               # lane width; all hidden/output dims padded to this
HIDDEN = (128, 64, 32)  # logical hidden sizes (pre-padding)


def _round_up(n, m):
    return ((n + m - 1) // m) * m


def _mlp_kernel(x_ref,
                w1_ref, b1_ref,
                w2_ref, b2_ref,
                w3_ref, b3_ref,
                w4_ref, b4_ref,
                o_ref):
    x = x_ref[...]        # (TB, 4)  fp32
    w1 = w1_ref[...]      # (4, 128) fp32

    # fc1 + relu — K=4 contraction done on the VPU (4 broadcast FMAs), not the MXU.
    h = b1_ref[...] + x[:, 0:1] * w1[0:1, :]
    h = h + x[:, 1:2] * w1[1:2, :]
    h = h + x[:, 2:3] * w1[2:3, :]
    h = h + x[:, 3:4] * w1[3:4, :]
    h = jnp.maximum(h, 0.0)

    # fc2 + relu (MXU, bf16 inputs, fp32 accumulation)
    h = jnp.dot(h.astype(jnp.bfloat16), w2_ref[...],
                preferred_element_type=jnp.float32) + b2_ref[...]
    h = jnp.maximum(h, 0.0)

    # fc3 + relu
    h = jnp.dot(h.astype(jnp.bfloat16), w3_ref[...],
                preferred_element_type=jnp.float32) + b3_ref[...]
    h = jnp.maximum(h, 0.0)

    # fc4 (no activation) — lane-dense (TB, 128) store; real 3 outputs sliced in wrapper.
    out = jnp.dot(h.astype(jnp.bfloat16), w4_ref[...],
                  preferred_element_type=jnp.float32) + b4_ref[...]
    o_ref[...] = out.astype(o_ref.dtype)


def pack_params(params_f32):
    """Pad PyTorch-semantics params to lane width and cast MXU weights to bf16.

    params_f32: tuple of 4 (w, b) pairs with w of shape (d_in, d_out), b of shape (d_out,),
    i.e. y = x @ w + b (equivalent to PyTorch's x @ W.T + b with W of shape (out, in)).
    """
    packed = []
    for i, (w, b) in enumerate(params_f32):
        d_in, d_out = w.shape
        d_in_p = IN_F if i == 0 else PAD
        wp = jnp.zeros((d_in_p, PAD), jnp.float32).at[:d_in, :d_out].set(w)
        bp = jnp.zeros((1, PAD), jnp.float32).at[0, :d_out].set(b)
        if i == 0:
            packed.extend([wp, bp])                       # layer 1 stays fp32 (VPU path)
        else:
            packed.extend([wp.astype(jnp.bfloat16), bp])  # MXU layers: bf16 weights, fp32 bias
    return tuple(packed)


@functools.partial(jax.jit, static_argnames=("block_batch",))
def simple_nn_forward(x, packed_params, *, block_batch=1024):
    """Fused MLP forward. x: (B, 4) fp32 -> (B, 3) fp32."""
    B = x.shape[0]
    TB = min(block_batch, _round_up(max(B, 1), 8))   # batch tile, multiple of 8
    Bp = _round_up(B, TB)
    xp = x if Bp == B else jnp.pad(x, ((0, Bp - B), (0, 0)))

    w1, b1, w2, b2, w3, b3, w4, b4 = packed_params

    def resident_spec(arr):
        # Constant block index -> DMA'd once, stays resident in VMEM across grid steps.
        return pl.BlockSpec(arr.shape, lambda i: (0, 0))

    out_padded = pl.pallas_call(
        _mlp_kernel,
        out_shape=jax.ShapeDtypeStruct((Bp, PAD), jnp.float32),
        grid=(Bp // TB,),
        in_specs=[
            pl.BlockSpec((TB, IN_F), lambda i: (i, 0)),
            resident_spec(w1), resident_spec(b1),
            resident_spec(w2), resident_spec(b2),
            resident_spec(w3), resident_spec(b3),
            resident_spec(w4), resident_spec(b4),
        ],
        out_specs=pl.BlockSpec((TB, PAD), lambda i: (i, 0)),
        compiler_params=pltpu.CompilerParams(
            dimension_semantics=("parallel",),        # megacore sharding on v7x
            vmem_limit_bytes=32 * 1024 * 1024,
        ),
    )(xp, w1, b1, w2, b2, w3, b3, w4, b4)

    return out_padded[:B, :OUT_F]


def init_params(key):
    """Deterministic init matching PyTorch Linear (stored as (in, out) so y = x @ w + b)."""
    dims = [(IN_F, HIDDEN[0]), (HIDDEN[0], HIDDEN[1]), (HIDDEN[1], HIDDEN[2]), (HIDDEN[2], OUT_F)]
    params = []
    for d_in, d_out in dims:
        kw, kb, key = jax.random.split(key, 3)
        bound = 1.0 / (d_in ** 0.5)                 # PyTorch default U(-1/sqrt(fan_in), .)
        w = jax.random.uniform(kw, (d_in, d_out), jnp.float32, -bound, bound)
        b = jax.random.uniform(kb, (d_out,), jnp.float32, -bound, bound)
        params.append((w, b))
    return tuple(params)


def reference_forward_bf16(x, params_f32):
    """Pure-JAX reference matching the kernel's numerics (bf16 MXU inputs, fp32 accum)."""
    (w1, b1), (w2, b2), (w3, b3), (w4, b4) = params_f32

    def mm(a, w):
        return jnp.dot(a.astype(jnp.bfloat16), w.astype(jnp.bfloat16),
                       preferred_element_type=jnp.float32)

    h = jnp.maximum(x @ w1 + b1, 0.0)
    h = jnp.maximum(mm(h, w2) + b2, 0.0)
    h = jnp.maximum(mm(h, w3) + b3, 0.0)
    return mm(h, w4) + b4


def reference_forward_f32(x, params_f32):
    """Exact fp32 PyTorch-semantics reference (sanity check for bf16 drift)."""
    (w1, b1), (w2, b2), (w3, b3), (w4, b4) = params_f32
    h = jnp.maximum(x @ w1 + b1, 0.0)
    h = jnp.maximum(h @ w2 + b2, 0.0)
    h = jnp.maximum(h @ w3 + b3, 0.0)
    return h @ w4 + b4


if __name__ == "__main__":
    key = jax.random.PRNGKey(0)
    kx, kp = jax.random.split(key)

    batch = 8
    x = jax.random.normal(kx, (batch, IN_F), jnp.float32)
    params_f32 = init_params(kp)
    packed = pack_params(params_f32)

    out = simple_nn_forward(x, packed)
    out = jax.block_until_ready(out)

    ref_bf16 = reference_forward_bf16(x, params_f32)
    ref_f32 = reference_forward_f32(x, params_f32)

    assert out.shape == (batch, OUT_F)
    assert jnp.allclose(out, ref_bf16, atol=2e-3, rtol=2e-3), "mismatch vs bf16-matched reference"
    assert jnp.allclose(out, ref_f32, atol=5e-2, rtol=5e-2), "mismatch vs fp32 reference"

    print("KERNEL_OK")
</pallas_src>

<mosaic_0001>
module attributes {stable_mosaic.version = 11 : i64} {
  func.func @_mlp_kernel(%arg0: i32, %arg1: memref<8x4xf32, #tpu.memory_space<vmem>>, %arg2: memref<4x128xf32, #tpu.memory_space<vmem>>, %arg3: memref<1x128xf32, #tpu.memory_space<vmem>>, %arg4: memref<128x128xbf16, #tpu.memory_space<vmem>>, %arg5: memref<1x128xf32, #tpu.memory_space<vmem>>, %arg6: memref<128x128xbf16, #tpu.memory_space<vmem>>, %arg7: memref<1x128xf32, #tpu.memory_space<vmem>>, %arg8: memref<128x128xbf16, #tpu.memory_space<vmem>>, %arg9: memref<1x128xf32, #tpu.memory_space<vmem>>, %arg10: memref<8x128xf32, #tpu.memory_space<vmem>>) attributes {dimension_semantics = [#tpu.dimension_semantics<parallel>], iteration_bounds = array<i64: 1>, scalar_prefetch = 0 : i64, scratch_operands = 0 : i64, tpu.core_type = #tpu.core_type<tc>, window_params = [{transform_indices = @transform_0, window_bounds = array<i64: 8, 4>}, {pipeline_mode = #tpu.pipeline_mode<synchronous>, transform_indices = @transform_1, window_bounds = array<i64: 4, 128>}, {pipeline_mode = #tpu.pipeline_mode<synchronous>, transform_indices = @transform_2, window_bounds = array<i64: 1, 128>}, {pipeline_mode = #tpu.pipeline_mode<synchronous>, transform_indices = @transform_3, window_bounds = array<i64: 128, 128>}, {pipeline_mode = #tpu.pipeline_mode<synchronous>, transform_indices = @transform_4, window_bounds = array<i64: 1, 128>}, {pipeline_mode = #tpu.pipeline_mode<synchronous>, transform_indices = @transform_5, window_bounds = array<i64: 128, 128>}, {pipeline_mode = #tpu.pipeline_mode<synchronous>, transform_indices = @transform_6, window_bounds = array<i64: 1, 128>}, {pipeline_mode = #tpu.pipeline_mode<synchronous>, transform_indices = @transform_7, window_bounds = array<i64: 128, 128>}, {pipeline_mode = #tpu.pipeline_mode<synchronous>, transform_indices = @transform_8, window_bounds = array<i64: 1, 128>}, {transform_indices = @transform_9, window_bounds = array<i64: 8, 128>}]} {
    %c0 = arith.constant 0 : index
    %c0_0 = arith.constant 0 : index
    %0 = vector.load %arg1[%c0, %c0_0] : memref<8x4xf32, #tpu.memory_space<vmem>>, vector<8x4xf32>
    %c0_1 = arith.constant 0 : index
    %c0_2 = arith.constant 0 : index
    %1 = vector.load %arg2[%c0_1, %c0_2] : memref<4x128xf32, #tpu.memory_space<vmem>>, vector<4x128xf32>
    %c0_3 = arith.constant 0 : index
    %c0_4 = arith.constant 0 : index
    %2 = vector.load %arg3[%c0_3, %c0_4] : memref<1x128xf32, #tpu.memory_space<vmem>>, vector<1x128xf32>
    %3 = vector.extract_strided_slice %0 {offsets = [0, 0], sizes = [8, 1], strides = [1, 1]} : vector<8x4xf32> to vector<8x1xf32>
    %4 = vector.extract_strided_slice %1 {offsets = [0, 0], sizes = [1, 128], strides = [1, 1]} : vector<4x128xf32> to vector<1x128xf32>
    %5 = vector.broadcast %3 : vector<8x1xf32> to vector<8x128xf32>
    %6 = vector.broadcast %4 : vector<1x128xf32> to vector<8x128xf32>
    %7 = arith.mulf %5, %6 : vector<8x128xf32>
    %8 = vector.broadcast %2 : vector<1x128xf32> to vector<8x128xf32>
    %9 = arith.addf %8, %7 : vector<8x128xf32>
    %10 = vector.extract_strided_slice %0 {offsets = [0, 1], sizes = [8, 1], strides = [1, 1]} : vector<8x4xf32> to vector<8x1xf32>
    %11 = vector.extract_strided_slice %1 {offsets = [1, 0], sizes = [1, 128], strides = [1, 1]} : vector<4x128xf32> to vector<1x128xf32>
    %12 = vector.broadcast %10 : vector<8x1xf32> to vector<8x128xf32>
    %13 = vector.broadcast %11 : vector<1x128xf32> to vector<8x128xf32>
    %14 = arith.mulf %12, %13 : vector<8x128xf32>
    %15 = arith.addf %9, %14 : vector<8x128xf32>
    %16 = vector.extract_strided_slice %0 {offsets = [0, 2], sizes = [8, 1], strides = [1, 1]} : vector<8x4xf32> to vector<8x1xf32>
    %17 = vector.extract_strided_slice %1 {offsets = [2, 0], sizes = [1, 128], strides = [1, 1]} : vector<4x128xf32> to vector<1x128xf32>
    %18 = vector.broadcast %16 : vector<8x1xf32> to vector<8x128xf32>
    %19 = vector.broadcast %17 : vector<1x128xf32> to vector<8x128xf32>
    %20 = arith.mulf %18, %19 : vector<8x128xf32>
    %21 = arith.addf %15, %20 : vector<8x128xf32>
    %22 = vector.extract_strided_slice %0 {offsets = [0, 3], sizes = [8, 1], strides = [1, 1]} : vector<8x4xf32> to vector<8x1xf32>
    %23 = vector.extract_strided_slice %1 {offsets = [3, 0], sizes = [1, 128], strides = [1, 1]} : vector<4x128xf32> to vector<1x128xf32>
    %24 = vector.broadcast %22 : vector<8x1xf32> to vector<8x128xf32>
    %25 = vector.broadcast %23 : vector<1x128xf32> to vector<8x128xf32>
    %26 = arith.mulf %24, %25 : vector<8x128xf32>
    %27 = arith.addf %21, %26 : vector<8x128xf32>
    %cst = arith.constant 0.000000e+00 : f32
    %28 = vector.broadcast %cst : f32 to vector<8x128xf32>
    %29 = arith.maximumf %27, %28 : vector<8x128xf32>
    %30 = arith.truncf %29 : vector<8x128xf32> to vector<8x128xbf16>
    %c0_5 = arith.constant 0 : index
    %c0_6 = arith.constant 0 : index
    %31 = vector.load %arg4[%c0_5, %c0_6] : memref<128x128xbf16, #tpu.memory_space<vmem>>, vector<128x128xbf16>
    %cst_7 = arith.constant dense<0.000000e+00> : vector<8x128xf32>
    %32 = tpu.matmul %30, %31, %cst_7 {dimension_numbers = #tpu.dot_dimension_numbers<[1], [0], [0], [1], [0, 0, 1, 1], [], []>} : vector<8x128xbf16>, vector<128x128xbf16>, vector<8x128xf32> -> vector<8x128xf32>
    %c0_8 = arith.constant 0 : index
    %c0_9 = arith.constant 0 : index
    %33 = vector.load %arg5[%c0_8, %c0_9] : memref<1x128xf32, #tpu.memory_space<vmem>>, vector<1x128xf32>
    %34 = vector.broadcast %33 : vector<1x128xf32> to vector<8x128xf32>
    %35 = arith.addf %32, %34 : vector<8x128xf32>
    %cst_10 = arith.constant 0.000000e+00 : f32
    %36 = vector.broadcast %cst_10 : f32 to vector<8x128xf32>
    %37 = arith.maximumf %35, %36 : vector<8x128xf32>
    %38 = arith.truncf %37 : vector<8x128xf32> to vector<8x128xbf16>
    %c0_11 = arith.constant 0 : index
    %c0_12 = arith.constant 0 : index
    %39 = vector.load %arg6[%c0_11, %c0_12] : memref<128x128xbf16, #tpu.memory_space<vmem>>, vector<128x128xbf16>
    %cst_13 = arith.constant dense<0.000000e+00> : vector<8x128xf32>
    %40 = tpu.matmul %38, %39, %cst_13 {dimension_numbers = #tpu.dot_dimension_numbers<[1], [0], [0], [1], [0, 0, 1, 1], [], []>} : vector<8x128xbf16>, vector<128x128xbf16>, vector<8x128xf32> -> vector<8x128xf32>
    %c0_14 = arith.constant 0 : index
    %c0_15 = arith.constant 0 : index
    %41 = vector.load %arg7[%c0_14, %c0_15] : memref<1x128xf32, #tpu.memory_space<vmem>>, vector<1x128xf32>
    %42 = vector.broadcast %41 : vector<1x128xf32> to vector<8x128xf32>
    %43 = arith.addf %40, %42 : vector<8x128xf32>
    %cst_16 = arith.constant 0.000000e+00 : f32
    %44 = vector.broadcast %cst_16 : f32 to vector<8x128xf32>
    %45 = arith.maximumf %43, %44 : vector<8x128xf32>
    %46 = arith.truncf %45 : vector<8x128xf32> to vector<8x128xbf16>
    %c0_17 = arith.constant 0 : index
    %c0_18 = arith.constant 0 : index
    %47 = vector.load %arg8[%c0_17, %c0_18] : memref<128x128xbf16, #tpu.memory_space<vmem>>, vector<128x128xbf16>
    %cst_19 = arith.constant dense<0.000000e+00> : vector<8x128xf32>
    %48 = tpu.matmul %46, %47, %cst_19 {dimension_numbers = #tpu.dot_dimension_numbers<[1], [0], [0], [1], [0, 0, 1, 1], [], []>} : vector<8x128xbf16>, vector<128x128xbf16>, vector<8x128xf32> -> vector<8x128xf32>
    %c0_20 = arith.constant 0 : index
    %c0_21 = arith.constant 0 : index
    %49 = vector.load %arg9[%c0_20, %c0_21] : memref<1x128xf32, #tpu.memory_space<vmem>>, vector<1x128xf32>
    %50 = vector.broadcast %49 : vector<1x128xf32> to vector<8x128xf32>
    %51 = arith.addf %48, %50 : vector<8x128xf32>
    %c0_22 = arith.constant 0 : index
    %c0_23 = arith.constant 0 : index
    %52 = vector.load %arg10[%c0_22, %c0_23] : memref<8x128xf32, #tpu.memory_space<vmem>>, vector<8x128xf32>
    tpu.vector_store %arg10[%c0_22, %c0_23], %51 {strides = array<i32>} : memref<8x128xf32, #tpu.memory_space<vmem>>, vector<8x128xf32>,
    return
  }
  func.func @transform_0(%arg0: i32) -> (i32, i32) {
    %c0_i32 = arith.constant 0 : i32
    %c0_i32_0 = arith.constant 0 : i32
    return %arg0, %c0_i32 : i32, i32
  }
  func.func @transform_1(%arg0: i32) -> (i32, i32) {
    %c0_i32 = arith.constant 0 : i32
    %c0_i32_0 = arith.constant 0 : i32
    %c0_i32_1 = arith.constant 0 : i32
    return %c0_i32, %c0_i32_0 : i32, i32
  }
  func.func @transform_2(%arg0: i32) -> (i32, i32) {
    %c0_i32 = arith.constant 0 : i32
    %c0_i32_0 = arith.constant 0 : i32
    %c0_i32_1 = arith.constant 0 : i32
    return %c0_i32, %c0_i32_0 : i32, i32
  }
  func.func @transform_3(%arg0: i32) -> (i32, i32) {
    %c0_i32 = arith.constant 0 : i32
    %c0_i32_0 = arith.constant 0 : i32
    %c0_i32_1 = arith.constant 0 : i32
    return %c0_i32, %c0_i32_0 : i32, i32
  }
  func.func @transform_4(%arg0: i32) -> (i32, i32) {
    %c0_i32 = arith.constant 0 : i32
    %c0_i32_0 = arith.constant 0 : i32
    %c0_i32_1 = arith.constant 0 : i32
    return %c0_i32, %c0_i32_0 : i32, i32
  }
  func.func @transform_5(%arg0: i32) -> (i32, i32) {
    %c0_i32 = arith.constant 0 : i32
    %c0_i32_0 = arith.constant 0 : i32
    %c0_i32_1 = arith.constant 0 : i32
    return %c0_i32, %c0_i32_0 : i32, i32
  }
  func.func @transform_6(%arg0: i32) -> (i32, i32) {
    %c0_i32 = arith.constant 0 : i32
    %c0_i32_0 = arith.constant 0 : i32
    %c0_i32_1 = arith.constant 0 : i32
    return %c0_i32, %c0_i32_0 : i32, i32
  }
  func.func @transform_7(%arg0: i32) -> (i32, i32) {
    %c0_i32 = arith.constant 0 : i32
    %c0_i32_0 = arith.constant 0 : i32
    %c0_i32_1 = arith.constant 0 : i32
    return %c0_i32, %c0_i32_0 : i32, i32
  }
  func.func @transform_8(%arg0: i32) -> (i32, i32) {
    %c0_i32 = arith.constant 0 : i32
    %c0_i32_0 = arith.constant 0 : i32
    %c0_i32_1 = arith.constant 0 : i32
    return %c0_i32, %c0_i32_0 : i32, i32
  }
  func.func @transform_9(%arg0: i32) -> (i32, i32) {
    %c0_i32 = arith.constant 0 : i32
    %c0_i32_0 = arith.constant 0 : i32
    return %arg0, %c0_i32 : i32, i32
  }
}

</mosaic_0001>

<llo_original>
// kernel: simple_nn_forward.1
$region0: #{simple_nn_forward.1}
  #allocation0 [shape = 'u32[]', space=smem, size = 0x4, offset = 0x4, fixed_abs, tag = 'smem constant byte address 0x4 - core index']
  #allocation1 [shape = 'u32[72,128]{1,0:T(1,128)}', space=vmem, size = 0x9000, scoped, tag = 'internal scratch']
  %s0 = inlined_call_operand.vmem [shape: f32[8,4], index: 0, kind: input, shape index: {}]
  %s1 = inlined_call_operand.vmem [shape: f32[4,128], index: 1, kind: input, shape index: {}]
  %s2 = inlined_call_operand.vmem [shape: f32[1,128], index: 2, kind: input, shape index: {}]
  %s3 = inlined_call_operand.hbm [shape: bf16[128,128], index: 3, kind: input, shape index: {}]
  %s4 = inlined_call_operand.vmem [shape: f32[1,128], index: 4, kind: input, shape index: {}]
  %s5 = inlined_call_operand.hbm [shape: bf16[128,128], index: 5, kind: input, shape index: {}]
  %s6 = inlined_call_operand.vmem [shape: f32[1,128], index: 6, kind: input, shape index: {}]
  %s7 = inlined_call_operand.hbm [shape: bf16[128,128], index: 7, kind: input, shape index: {}]
  %s8 = inlined_call_operand.vmem [shape: f32[1,128], index: 8, kind: input, shape index: {}]
  %s9 = inlined_call_operand.vmem [shape: f32[8,128], index: 9, kind: output, shape index: {}]
  %s10 = sld [smem:[#allocation0]]
  $region58: #{simple_nn_forward.1} parent=0
    _
  %s12 = ssub.s32 1, %s10
  %s13 = scalar_select 0, %s12, %s10
  $region1: #{simple_nn_forward.1} parent=0
    #allocation2 [shape = 'u8[32768]{0}', space=vmem, size = 0x8000, scoped, tag = 'input window, operand 3, single buffered']
    #allocation3 [shape = 's32[1]{0}', space=sflag, size = 0x4, scoped, tag = 'scoped memory for simple_nn_forward.1']
    #allocation4 [shape = 'u8[32768]{0}', space=vmem, size = 0x8000, scoped, tag = 'input window, operand 5, single buffered']
    #allocation5 [shape = 's32[1]{0}', space=sflag, size = 0x4, scoped, tag = 'scoped memory for simple_nn_forward.1']
    #allocation6 [shape = 'u8[32768]{0}', space=vmem, size = 0x8000, scoped, tag = 'input window, operand 7, single buffered']
    %14 = vsyncpa [#allocation3], 0
    %15 = vsyncpa [#allocation5], 0
    // Predicated region
    $region2: #{simple_nn_forward.1} parent=1 // pred_check
      _
    $region3: #{simple_nn_forward.1} parent=1 // pred_check_branch
      %17 = sbr.rel (0) target = $region5
    $region4: #{simple_nn_forward.1} parent=1 // pred_region
      _
    $region5: #{simple_nn_forward.1} parent=1 // pred_fallthru
      _
    // Predicated region
    $region6: #{simple_nn_forward.1} parent=1 // pred_check
      _
    $region7: #{simple_nn_forward.1} parent=1 // pred_check_branch
      %19 = sbr.rel (0) target = $region9
    $region8: #{simple_nn_forward.1} parent=1 // pred_region
      _
    $region9: #{simple_nn_forward.1} parent=1 // pred_fallthru
      _
    // Predicated region
    $region10: #{simple_nn_forward.1} parent=1 // pred_check
      _
    $region11: #{simple_nn_forward.1} parent=1 // pred_check_branch
      %21 = sbr.rel (0) target = $region13
    $region12: #{simple_nn_forward.1} parent=1 // pred_region
      _
    $region13: #{simple_nn_forward.1} parent=1 // pred_fallthru
      _
    // Predicated region
    $region14: #{simple_nn_forward.1} parent=1 // pred_check
      _
    $region15: #{simple_nn_forward.1} parent=1 // pred_check_branch
      %23 = sbr.rel (0) target = $region17
    $region16: #{simple_nn_forward.1} parent=1 // pred_region
      %25 = vsyncadd [#allocation3], 0
      %s26 = sshll.u32 %s3, 4
      %s27 = int_to_ptr.hbm [resolvable:$true] %s26
      %s28 = sshll.u32 [#allocation2], 4
      %s29 = int_to_ptr.vmem [resolvable:$true] %s28
      %34 = dma.hbm_to_vmem [thread:$0]  %s27, 1024, %s29, [#allocation3], 64, 64, 4
    $region17: #{simple_nn_forward.1} parent=1 // pred_fallthru
      _
    // Predicated region
    $region18: #{simple_nn_forward.1} parent=1 // pred_check
      _
    $region19: #{simple_nn_forward.1} parent=1 // pred_check_branch
      %36 = sbr.rel (0) target = $region21
    $region20: #{simple_nn_forward.1} parent=1 // pred_region
      _
    $region21: #{simple_nn_forward.1} parent=1 // pred_fallthru
      _
    // Predicated region
    $region22: #{simple_nn_forward.1} parent=1 // pred_check
      _
    $region23: #{simple_nn_forward.1} parent=1 // pred_check_branch
      %38 = sbr.rel (0) target = $region25
    $region24: #{simple_nn_forward.1} parent=1 // pred_region
      %40 = vsyncadd [#allocation5], 0
      %s41 = sshll.u32 %s5, 4
      %s42 = int_to_ptr.hbm [resolvable:$true] %s41
      %s43 = sshll.u32 [#allocation4], 4
      %s44 = int_to_ptr.vmem [resolvable:$true] %s43
      %49 = dma.hbm_to_vmem [thread:$0]  %s42, 1024, %s44, [#allocation5], 64, 64, 4
    $region25: #{simple_nn_forward.1} parent=1 // pred_fallthru
      _
    // Predicated region
    $region26: #{simple_nn_forward.1} parent=1 // pred_check
      _
    $region27: #{simple_nn_forward.1} parent=1 // pred_check_branch
      %51 = sbr.rel (0) target = $region29
    $region28: #{simple_nn_forward.1} parent=1 // pred_region
      _
    $region29: #{simple_nn_forward.1} parent=1 // pred_fallthru
      _
    // Predicated region
    $region30: #{simple_nn_forward.1} parent=1 // pred_check
      _
    $region31: #{simple_nn_forward.1} parent=1 // pred_check_branch
      %53 = sbr.rel (0) target = $region33
    $region32: #{simple_nn_forward.1} parent=1 // pred_region
      %55 = vsyncadd [#allocation5], 0
      %s56 = sshll.u32 %s7, 4
      %s57 = int_to_ptr.hbm [resolvable:$true] %s56
      %s58 = sshll.u32 [#allocation6], 4
      %s59 = int_to_ptr.vmem [resolvable:$true] %s58
      %64 = dma.hbm_to_vmem [thread:$0]  %s57, 1024, %s59, [#allocation5], 64, 64, 4
    $region33: #{simple_nn_forward.1} parent=1 // pred_fallthru
      _
    // Predicated region
    $region34: #{simple_nn_forward.1} parent=1 // pred_check
      _
    $region35: #{simple_nn_forward.1} parent=1 // pred_check_branch
      %66 = sbr.rel (0) target = $region37
    $region36: #{simple_nn_forward.1} parent=1 // pred_region
      _
    $region37: #{simple_nn_forward.1} parent=1 // pred_fallthru
      _
    // Predicated region
    $region38: #{simple_nn_forward.1} parent=1 // pred_check
      _
    $region39: #{simple_nn_forward.1} parent=1 // pred_check_branch
      %68 = sbr.rel (0) target = $region41
    $region40: #{simple_nn_forward.1} parent=1 // pred_region
      %70 = dma.done [#allocation3], 1024
    $region41: #{simple_nn_forward.1} parent=1 // pred_fallthru
      _
    // Predicated region
    $region42: #{simple_nn_forward.1} parent=1 // pred_check
      _
    $region43: #{simple_nn_forward.1} parent=1 // pred_check_branch
      %72 = sbr.rel (0) target = $region45
    $region44: #{simple_nn_forward.1} parent=1 // pred_region
      %74 = dma.done [#allocation5], 1024
    $region45: #{simple_nn_forward.1} parent=1 // pred_fallthru
      _
    // Predicated region
    $region46: #{simple_nn_forward.1} parent=1 // pred_check
      _
    $region47: #{simple_nn_forward.1} parent=1 // pred_check_branch
      %76 = sbr.rel (0) target = $region49
    $region48: #{simple_nn_forward.1} parent=1 // pred_region
      %78 = dma.done [#allocation5], 1024
    $region49: #{simple_nn_forward.1} parent=1 // pred_fallthru
      _
    %v79 = vld [vmem:[%s0] sm:$0xff]
    %v80 = vld [vmem:[%s1] sm:$0xf]
    %v81 = vld [vmem:[%s2] sm:$0x1]
    %83 = vset.pattern.permute.xlu0 0
    %84 = vperm.xlu0 %83, %v79
    %v85 = vpop.permute.xlu0 %84
    %v87 = vperm.slane %v80, 0
    %v88 = vmul.f32 %v85, %v87
    %v90 = vperm.slane %v81, 0
    %v92 = vadd.f32 %v90, %v88
    %93 = vset.pattern.permute.xlu0 1
    %94 = vperm.xlu0 %93, %v79
    %v95 = vpop.permute.xlu0 %94
    %v97 = vperm.slane %v80, 1
    %v98 = vmul.f32 %v95, %v97
    %v99 = vadd.f32 %v92, %v98
    %100 = vset.pattern.permute.xlu0 2
    %101 = vperm.xlu0 %100, %v79
    %v102 = vpop.permute.xlu0 %101
    %v104 = vperm.slane %v80, 2
    %v105 = vmul.f32 %v102, %v104
    %v106 = vadd.f32 %v99, %v105
    %107 = vset.pattern.permute.xlu0 3
    %108 = vperm.xlu0 %107, %v79
    %v109 = vpop.permute.xlu0 %108
    %v111 = vperm.slane %v80, 3
    %v112 = vmul.f32 %v109, %v111
    %v113 = vadd.f32 %v106, %v112
    %v114 = vmax.f32 %v113, 0.0
    %v115 = vpack.c.bf16 %v114, %v114
    %v116 = vld [vmem:[#allocation2] sm:$0xf]
    %v117 = vld [vmem:[#allocation2 + $0x4] sm:$0xf]
    %v118 = vld [vmem:[#allocation2 + $0x8] sm:$0xf]
    %v119 = vld [vmem:[#allocation2 + $0xc] sm:$0xf]
    %v120 = vld [vmem:[#allocation2 + $0x10] sm:$0xf]
    %v121 = vld [vmem:[#allocation2 + $0x14] sm:$0xf]
    %v122 = vld [vmem:[#allocation2 + $0x18] sm:$0xf]
    %v123 = vld [vmem:[#allocation2 + $0x1c] sm:$0xf]
    %v124 = vld [vmem:[#allocation2 + $0x20] sm:$0xf]
    %v125 = vld [vmem:[#allocation2 + $0x24] sm:$0xf]
    %v126 = vld [vmem:[#allocation2 + $0x28] sm:$0xf]
    %v127 = vld [vmem:[#allocation2 + $0x2c] sm:$0xf]
    %v128 = vld [vmem:[#allocation2 + $0x30] sm:$0xf]
    %v129 = vld [vmem:[#allocation2 + $0x34] sm:$0xf]
    %v130 = vld [vmem:[#allocation2 + $0x38] sm:$0xf]
    %v131 = vld [vmem:[#allocation2 + $0x3c] sm:$0xf]
    %v132 = vld [vmem:[%s4] sm:$0x1]
    %v134 = vperm.slane %v132, 0
    %v152 = vunpack.c.l.b16 %v116
    %v153 = vunpack.c.l.b16 %v117
    %v154 = vunpack.c.l.b16 %v118
    %v155 = vunpack.c.l.b16 %v119
    %v156 = vunpack.c.l.b16 %v120
    %v157 = vunpack.c.l.b16 %v121
    %v158 = vunpack.c.l.b16 %v122
    %v159 = vunpack.c.l.b16 %v123
    %v160 = vunpack.c.l.b16 %v124
    %v161 = vunpack.c.l.b16 %v125
    %v162 = vunpack.c.l.b16 %v126
    %v163 = vunpack.c.l.b16 %v127
    %v164 = vunpack.c.l.b16 %v128
    %v165 = vunpack.c.l.b16 %v129
    %v166 = vunpack.c.l.b16 %v130
    %v167 = vunpack.c.l.b16 %v131
    %v168 = vpack.c.b16 %v153, %v152
    %v169 = vpack.c.b16 %v155, %v154
    %v170 = vpack.c.b16 %v157, %v156
    %v171 = vpack.c.b16 %v159, %v158
    %v172 = vpack.c.b16 %v161, %v160
    %v173 = vpack.c.b16 %v163, %v162
    %v174 = vpack.c.b16 %v165, %v164
    %v175 = vpack.c.b16 %v167, %v166
    %184 = vmatpush.bf16.msra.mxu0 %v175
    %185 = vmatpush.bf16.msra.mxu0 %v174
    %186 = vmatpush.bf16.msra.mxu0 %v173
    %187 = vmatpush.bf16.msra.mxu0 %v172
    %188 = vmatpush.bf16.msra.mxu0 %v171
    %189 = vmatpush.bf16.msra.mxu0 %v170
    %190 = vmatpush.bf16.msra.mxu0 %v169
    %191 = vmatpush.bf16.msra.mxu0 %v168
    %192 = vmatmul.bf16.gmra.mxu0 %v115
    %v193 = vpop.f32.mrf.mxu0
    %v194 = vadd.f32 %v134, %v193
    %v195 = vpop.f32.mrf.mxu0
    %196 = vdwg.mxu0
    %v197 = vmax.f32 %v194, 0.0
    %v198 = vpack.c.bf16 %v197, %v197
    %v199 = vld [vmem:[#allocation4] sm:$0xf]
    %v200 = vld [vmem:[#allocation4 + $0x4] sm:$0xf]
    %v201 = vld [vmem:[#allocation4 + $0x8] sm:$0xf]
    %v202 = vld [vmem:[#allocation4 + $0xc] sm:$0xf]
    %v203 = vld [vmem:[#allocation4 + $0x10] sm:$0xf]
    %v204 = vld [vmem:[#allocation4 + $0x14] sm:$0xf]
    %v205 = vld [vmem:[#allocation4 + $0x18] sm:$0xf]
    %v206 = vld [vmem:[#allocation4 + $0x1c] sm:$0xf]
    %v207 = vld [vmem:[#allocation4 + $0x20] sm:$0xf]
    %v208 = vld [vmem:[#allocation4 + $0x24] sm:$0xf]
    %v209 = vld [vmem:[#allocation4 + $0x28] sm:$0xf]
    %v210 = vld [vmem:[#allocation4 + $0x2c] sm:$0xf]
    %v211 = vld [vmem:[#allocation4 + $0x30] sm:$0xf]
    %v212 = vld [vmem:[#allocation4 + $0x34] sm:$0xf]
    %v213 = vld [vmem:[#allocation4 + $0x38] sm:$0xf]
    %v214 = vld [vmem:[#allocation4 + $0x3c] sm:$0xf]
    %v215 = vld [vmem:[%s6] sm:$0x1]
    %v217 = vperm.slane %v215, 0
    %v235 = vunpack.c.l.b16 %v199
    %v236 = vunpack.c.l.b16 %v200
    %v237 = vunpack.c.l.b16 %v201
    %v238 = vunpack.c.l.b16 %v202
    %v239 = vunpack.c.l.b16 %v203
    %v240 = vunpack.c.l.b16 %v204
    %v241 = vunpack.c.l.b16 %v205
    %v242 = vunpack.c.l.b16 %v206
    %v243 = vunpack.c.l.b16 %v207
    %v244 = vunpack.c.l.b16 %v208
    %v245 = vunpack.c.l.b16 %v209
    %v246 = vunpack.c.l.b16 %v210
    %v247 = vunpack.c.l.b16 %v211
    %v248 = vunpack.c.l.b16 %v212
    %v249 = vunpack.c.l.b16 %v213
    %v250 = vunpack.c.l.b16 %v214
    %v251 = vpack.c.b16 %v236, %v235
    %v252 = vpack.c.b16 %v238, %v237
    %v253 = vpack.c.b16 %v240, %v239
    %v254 = vpack.c.b16 %v242, %v241
    %v255 = vpack.c.b16 %v244, %v243
    %v256 = vpack.c.b16 %v246, %v245
    %v257 = vpack.c.b16 %v248, %v247
    %v258 = vpack.c.b16 %v250, %v249
    %267 = vmatpush.bf16.msra.mxu0 %v258
    %268 = vmatpush.bf16.msra.mxu0 %v257
    %269 = vmatpush.bf16.msra.mxu0 %v256
    %270 = vmatpush.bf16.msra.mxu0 %v255
    %271 = vmatpush.bf16.msra.mxu0 %v254
    %272 = vmatpush.bf16.msra.mxu0 %v253
    %273 = vmatpush.bf16.msra.mxu0 %v252
    %274 = vmatpush.bf16.msra.mxu0 %v251
    %275 = vmatmul.bf16.gmra.mxu0 %v198
    %v276 = vpop.f32.mrf.mxu0
    %v277 = vadd.f32 %v217, %v276
    %v278 = vpop.f32.mrf.mxu0
    %279 = vdwg.mxu0
    %v280 = vmax.f32 %v277, 0.0
    %v281 = vpack.c.bf16 %v280, %v280
    %v282 = vld [vmem:[#allocation6] sm:$0xf]
    %v283 = vld [vmem:[#allocation6 + $0x4] sm:$0xf]
    %v284 = vld [vmem:[#allocation6 + $0x8] sm:$0xf]
    %v285 = vld [vmem:[#allocation6 + $0xc] sm:$0xf]
    %v286 = vld [vmem:[#allocation6 + $0x10] sm:$0xf]
    %v287 = vld [vmem:[#allocation6 + $0x14] sm:$0xf]
    %v288 = vld [vmem:[#allocation6 + $0x18] sm:$0xf]
    %v289 = vld [vmem:[#allocation6 + $0x1c] sm:$0xf]
    %v290 = vld [vmem:[#allocation6 + $0x20] sm:$0xf]
    %v291 = vld [vmem:[#allocation6 + $0x24] sm:$0xf]
    %v292 = vld [vmem:[#allocation6 + $0x28] sm:$0xf]
    %v293 = vld [vmem:[#allocation6 + $0x2c] sm:$0xf]
    %v294 = vld [vmem:[#allocation6 + $0x30] sm:$0xf]
    %v295 = vld [vmem:[#allocation6 + $0x34] sm:$0xf]
    %v296 = vld [vmem:[#allocation6 + $0x38] sm:$0xf]
    %v297 = vld [vmem:[#allocation6 + $0x3c] sm:$0xf]
    %v298 = vld [vmem:[%s8] sm:$0x1]
    %v300 = vperm.slane %v298, 0
    %v318 = vunpack.c.l.b16 %v282
    %v319 = vunpack.c.l.b16 %v283
    %v320 = vunpack.c.l.b16 %v284
    %v321 = vunpack.c.l.b16 %v285
    %v322 = vunpack.c.l.b16 %v286
    %v323 = vunpack.c.l.b16 %v287
    %v324 = vunpack.c.l.b16 %v288
    %v325 = vunpack.c.l.b16 %v289
    %v326 = vunpack.c.l.b16 %v290
    %v327 = vunpack.c.l.b16 %v291
    %v328 = vunpack.c.l.b16 %v292
    %v329 = vunpack.c.l.b16 %v293
    %v330 = vunpack.c.l.b16 %v294
    %v331 = vunpack.c.l.b16 %v295
    %v332 = vunpack.c.l.b16 %v296
    %v333 = vunpack.c.l.b16 %v297
    %v334 = vpack.c.b16 %v319, %v318
    %v335 = vpack.c.b16 %v321, %v320
    %v336 = vpack.c.b16 %v323, %v322
    %v337 = vpack.c.b16 %v325, %v324
    %v338 = vpack.c.b16 %v327, %v326
    %v339 = vpack.c.b16 %v329, %v328
    %v340 = vpack.c.b16 %v331, %v330
    %v341 = vpack.c.b16 %v333, %v332
    %350 = vmatpush.bf16.msra.mxu0 %v341
    %351 = vmatpush.bf16.msra.mxu0 %v340
    %352 = vmatpush.bf16.msra.mxu0 %v339
    %353 = vmatpush.bf16.msra.mxu0 %v338
    %354 = vmatpush.bf16.msra.mxu0 %v337
    %355 = vmatpush.bf16.msra.mxu0 %v336
    %356 = vmatpush.bf16.msra.mxu0 %v335
    %357 = vmatpush.bf16.msra.mxu0 %v334
    %358 = vmatmul.bf16.gmra.mxu0 %v281
    %v359 = vpop.f32.mrf.mxu0
    %v360 = vadd.f32 %v300, %v359
    %v361 = vpop.f32.mrf.mxu0
    %362 = vdwg.mxu0
    %363 = vst [vmem:[%s9] sm:$0xff] %v360
    // Predicated region
    $region50: #{simple_nn_forward.1} parent=1 // pred_check
      _
    $region51: #{simple_nn_forward.1} parent=1 // pred_check_branch
      %365 = sbr.rel (0) target = $region53
    $region52: #{simple_nn_forward.1} parent=1 // pred_region
      _
    $region53: #{simple_nn_forward.1} parent=1 // pred_fallthru
      _
    // Predicated region
    $region54: #{simple_nn_forward.1} parent=1 // pred_check
      _
    $region55: #{simple_nn_forward.1} parent=1 // pred_check_branch
      %367 = sbr.rel (0) target = $region57
    $region56: #{simple_nn_forward.1} parent=1 // pred_region
      _
    $region57: #{simple_nn_forward.1} parent=1 // pred_fallthru
      _
    %368 = vsyncpa [#allocation3], 1
    %369 = vsyncpa [#allocation5], 1

</llo_original>
